<compile_context>
chip_gen: v6e
topology: v6e:2x2x1
jax: 0.10.0
libtpu: 0.0.40
codegen_flags: <defaults>
</compile_context>

<pallas_src>
import functools
import math

import jax
import jax.numpy as jnp
from jax import lax
from jax.experimental import pallas as pl
from jax.experimental.pallas import tpu as pltpu


NEG_SLOPE = 0.2        # GATConv negative_slope
MASK_VALUE = -1e30     # masked logit; exp(MASK - m) underflows to exactly 0


def _device_kind():
    try:
        return jax.devices()[0].device_kind.lower()
    except Exception:
        return ""


_KIND = _device_kind()
_IS_V5 = "v5" in _KIND
# bf16 VALU/EUP exist on v6e / v7x only; elsewhere keep f32 elementwise math.
_HAS_BF16_VPU = ("v6" in _KIND) or ("7" in _KIND)
# v5e/v6e have 128 MiB physical VMEM -> ~100 MiB budget; v7x (64 MiB) and
# unknown chips -> conservative 48 MiB.
_VMEM_BUDGET = (100 if ("v5" in _KIND or "v6" in _KIND) else 48) * 1024 * 1024


def _round_up(v, m):
    return ((v + m - 1) // m) * m


def _choose_tiling(n, n_heads):
    """Pad N to a multiple of 128 lanes; pick a destination-row tile TM."""
    n_pad = _round_up(max(n, 1), 128)
    candidates = [t for t in (1024, 512, 256, 128)
                  if t <= n_pad and n_pad % t == 0]
    tm = 128
    for c in candidates:
        # double-buffered bf16 alpha (H,TM,N) + adj (TM,N) blocks and ~3 f32
        # (TM,N) temporaries in the softmax kernel must fit the budget.
        ws = 2 * (n_heads + 1) * c * n_pad * 2 + 3 * c * n_pad * 4
        if ws <= int(_VMEM_BUDGET * 0.6):
            tm = c
            break
    # keep >=2 grid steps when possible so megacore sharding / pipelining kick in
    if tm == n_pad and n_pad >= 256 and (n_pad // 2) % 128 == 0:
        tm = n_pad // 2
    return n_pad, tm


def _compiler_params(dims):
    return pltpu.CompilerParams(
        dimension_semantics=dims,
        vmem_limit_bytes=_VMEM_BUDGET,
    )


def _spec(shape, index_map, deep_buffer=False):
    """BlockSpec, optionally triple-buffered (v5e only)."""
    if deep_buffer:
        try:
            return pl.BlockSpec(shape, index_map, pipeline_mode=pl.Buffered(3))
        except Exception:
            pass
    return pl.BlockSpec(shape, index_map)


# ----------------------------------------------------------------------------
# Kernel 1: x @ W  +  per-head attention coefficients (one lane-dense matmul)
# ----------------------------------------------------------------------------
def _proj_kernel(x_ref, w_ref, attmat_ref, h_ref, coef_ref):
    x = x_ref[...].astype(jnp.bfloat16)                       # (TM, F)
    w = w_ref[...].astype(jnp.bfloat16)                       # (F, HC)
    h = jnp.dot(x, w, preferred_element_type=jnp.float32)     # (TM, HC) f32 acc
    h_bf = h.astype(jnp.bfloat16)
    h_ref[...] = h_bf
    # block-diagonal att matrix (HC, 2H): cols [0:H]=att_src, [H:2H]=att_dst
    # bf16 x bf16 -> single-pass MXU op with f32 accumulation.
    coef_ref[...] = jnp.dot(h_bf, attmat_ref[...],
                            preferred_element_type=jnp.float32)   # (TM, 2H)


def gat_project(x, w, att_mat_bf16, tm):
    n_pad, f = x.shape
    hc = w.shape[1]
    two_h = att_mat_bf16.shape[1]
    grid = (n_pad // tm,)
    return pl.pallas_call(
        _proj_kernel,
        grid=grid,
        in_specs=[
            pl.BlockSpec((tm, f), lambda i: (i, 0)),
            pl.BlockSpec((f, hc), lambda i: (0, 0)),
            pl.BlockSpec((hc, two_h), lambda i: (0, 0)),
        ],
        out_specs=[
            pl.BlockSpec((tm, hc), lambda i: (i, 0)),
            pl.BlockSpec((tm, two_h), lambda i: (i, 0)),
        ],
        out_shape=(
            jax.ShapeDtypeStruct((n_pad, hc), jnp.bfloat16),
            jax.ShapeDtypeStruct((n_pad, two_h), jnp.float32),
        ),
        compiler_params=_compiler_params(("parallel",)),
    )(x, w, att_mat_bf16)


# ----------------------------------------------------------------------------
# Kernel 2: masked per-destination-row attention softmax  -> alpha (bf16)
# ----------------------------------------------------------------------------
def _attention_kernel(dst_ref, srcT_ref, adj_ref, alpha_ref, *,
                      n_heads, compute_dtype):
    adj_mask = adj_ref[...] > 0                               # (TM, N) bool
    for hd in range(n_heads):                                 # static head loop
        dst_col = dst_ref[:, hd:hd + 1].astype(compute_dtype)     # (TM, 1)
        src_row = srcT_ref[hd:hd + 1, :].astype(compute_dtype)    # (1, N)
        logits = dst_col + src_row                            # (TM, N)
        # leaky_relu with 0<slope<1: max(x, slope*x) (mul+max, no select)
        logits = jnp.maximum(logits, NEG_SLOPE * logits)
        masked = jnp.where(adj_mask, logits, MASK_VALUE)
        m = jnp.max(masked, axis=1, keepdims=True)
        e = jnp.exp(masked - m)                               # masked -> exactly 0
        s = jnp.sum(e, axis=1, keepdims=True, dtype=jnp.float32)   # f32 row sum
        r = pl.reciprocal(s, approx=True).astype(compute_dtype)
        alpha_ref[hd] = (e * r).astype(jnp.bfloat16)


def gat_attention(dst_coef, src_t, adj_bf16, n_heads, tm):
    n_pad = adj_bf16.shape[1]
    compute_dtype = jnp.bfloat16 if _HAS_BF16_VPU else jnp.float32
    kernel = functools.partial(_attention_kernel, n_heads=n_heads,
                               compute_dtype=compute_dtype)
    grid = (n_pad // tm,)
    return pl.pallas_call(
        kernel,
        grid=grid,
        in_specs=[
            pl.BlockSpec((tm, n_heads), lambda i: (i, 0)),
            pl.BlockSpec((n_heads, n_pad), lambda i: (0, 0)),
            _spec((tm, n_pad), lambda i: (i, 0), deep_buffer=_IS_V5),
        ],
        out_specs=pl.BlockSpec((n_heads, tm, n_pad), lambda i: (0, i, 0)),
        out_shape=jax.ShapeDtypeStruct((n_heads, n_pad, n_pad), jnp.bfloat16),
        compiler_params=_compiler_params(("parallel",)),
    )(dst_coef, src_t, adj_bf16)


# ----------------------------------------------------------------------------
# Kernel 3: top-k-thresholded aggregation + bias + TopKPooling score
# ----------------------------------------------------------------------------
def _aggregate_kernel(alpha_ref, h_ref, thr_ref, bias_ref, poolw_ref,
                      out_ref, score_ref, *, n_heads, head_dim):
    parts = []
    for hd in range(n_heads):
        a = alpha_ref[hd]                                     # (TM, N) bf16
        thr_b = thr_ref[hd].astype(jnp.bfloat16)              # exact bf16 value
        a = jnp.where(a >= thr_b, a, jnp.zeros_like(a))       # bf16 compare/select
        hh = h_ref[:, hd * head_dim:(hd + 1) * head_dim]      # (N, C) bf16
        parts.append(jnp.dot(a, hh, preferred_element_type=jnp.float32))
    out = jnp.concatenate(parts, axis=1) + bias_ref[...]      # (TM, HC)
    out_ref[...] = out
    # TopKPooling score: tanh(out . w / ||w||) as one (TM,HC)x(HC,1) matmul
    score_ref[...] = jnp.tanh(
        jnp.dot(out, poolw_ref[...], preferred_element_type=jnp.float32))


def gat_aggregate(alpha, h_bf16, thr, bias, pool_w, n_heads, head_dim, tm):
    n_pad = h_bf16.shape[0]
    hc = n_heads * head_dim
    kernel = functools.partial(_aggregate_kernel,
                               n_heads=n_heads, head_dim=head_dim)
    grid = (n_pad // tm,)
    return pl.pallas_call(
        kernel,
        grid=grid,
        in_specs=[
            _spec((n_heads, tm, n_pad), lambda i: (0, i, 0), deep_buffer=_IS_V5),
            pl.BlockSpec((n_pad, hc), lambda i: (0, 0)),
            pl.BlockSpec(memory_space=pltpu.MemorySpace.SMEM),   # thr (H,) scalars
            pl.BlockSpec((1, hc), lambda i: (0, 0)),
            pl.BlockSpec((hc, 1), lambda i: (0, 0)),
        ],
        out_specs=[
            pl.BlockSpec((tm, hc), lambda i: (i, 0)),
            pl.BlockSpec((tm, 1), lambda i: (i, 0)),
        ],
        out_shape=(
            jax.ShapeDtypeStruct((n_pad, hc), jnp.float32),
            jax.ShapeDtypeStruct((n_pad, 1), jnp.float32),
        ),
        compiler_params=_compiler_params(("parallel",)),
    )(alpha, h_bf16, thr, bias, pool_w)


# ----------------------------------------------------------------------------
# Kernel 4: global_add_pool of selected & score-scaled nodes: (G,N) @ (N,HC),
#           tiled over the N contraction with a resident f32 accumulator.
# ----------------------------------------------------------------------------
def _pool_readout_kernel(sel_ref, x_ref, emb_ref):
    @pl.when(pl.program_id(0) == 0)
    def _():
        emb_ref[...] = jnp.zeros_like(emb_ref)
    emb_ref[...] += jnp.dot(sel_ref[...], x_ref[...],
                            preferred_element_type=jnp.float32)


def pool_readout(sel_scaled, out_pad, tm):
    g, n_pad = sel_scaled.shape
    hc = out_pad.shape[1]
    grid = (n_pad // tm,)
    return pl.pallas_call(
        _pool_readout_kernel,
        grid=grid,
        in_specs=[
            pl.BlockSpec((g, tm), lambda k: (0, k)),
            pl.BlockSpec((tm, hc), lambda k: (k, 0)),
        ],
        out_specs=pl.BlockSpec((g, hc), lambda k: (0, 0)),
        out_shape=jax.ShapeDtypeStruct((g, hc), jnp.float32),
        compiler_params=_compiler_params(("arbitrary",)),
    )(sel_scaled, out_pad)


# ----------------------------------------------------------------------------
# Full GTA_DDI_Block forward (glue in JAX, hot paths in Pallas)
# ----------------------------------------------------------------------------
def gta_ddi_block_forward(x, edge_index, batch, num_graphs, params,
                          n_heads, head_dim):
    n, f = x.shape
    hc = n_heads * head_dim
    n_pad, tm = _choose_tiling(n, n_heads)

    # --- GATConv self-loop handling: remove self loops, add all self loops.
    # Dense adjacency built directly in bf16 (no f32 build + convert pass).
    src, dst = edge_index[0], edge_index[1]
    not_self = (src != dst).astype(jnp.bfloat16)
    adj = jnp.zeros((n_pad, n_pad), jnp.bfloat16).at[dst, src].max(not_self)
    # self loops everywhere (incl. padded rows -> no empty-row NaN in softmax)
    adj = jnp.maximum(adj, jnp.eye(n_pad, dtype=jnp.bfloat16))

    idx = jnp.arange(n_pad)
    real = idx < n
    real_edge = (adj > 0) & real[:, None] & real[None, :]     # excludes pad diag

    x_pad = jnp.zeros((n_pad, f), x.dtype).at[:n].set(x)

    # block-diagonal attention matrix (HC, 2H): cols [0:H]=att_src, [H:2H]=att_dst
    att_mat = jnp.zeros((hc, 2 * n_heads), jnp.float32)
    for hd in range(n_heads):
        sl = slice(hd * head_dim, (hd + 1) * head_dim)
        att_mat = att_mat.at[sl, hd].set(params['att_src'][hd])
        att_mat = att_mat.at[sl, n_heads + hd].set(params['att_dst'][hd])
    att_mat_bf16 = att_mat.astype(jnp.bfloat16)

    # --- Kernel 1: projection + attention coefficients
    h_bf16, coef = gat_project(x_pad, params['w'], att_mat_bf16, tm)
    src_t = coef[:, :n_heads].T                               # (H, N_pad)
    dst_coef = coef[:, n_heads:]                              # (N_pad, H)

    # --- Kernel 2: masked softmax attention (bf16 alpha)
    alpha = gat_attention(dst_coef, src_t, adj, n_heads, tm)

    # --- per-head top-k threshold over real edges (k = max(int(0.5*N), 1)),
    # computed directly on the bf16 alpha (no f32 copy of the (H,N,N) tensor).
    k = max(int(0.5 * n), 1)
    masked_alpha = jnp.where(real_edge[None], alpha,
                             jnp.asarray(-jnp.inf, jnp.bfloat16)
                             ).reshape(n_heads, -1)
    thr = lax.top_k(masked_alpha, k)[0][:, -1].astype(jnp.float32)   # (H,) f32

    # --- Kernel 3: thresholded aggregation + bias + TopKPooling score
    pool_w = params['pool_w']
    pool_w_scaled = (pool_w / jnp.linalg.norm(pool_w))[:, None]   # (HC, 1)
    out_pad, score2d = gat_aggregate(alpha, h_bf16, thr,
                                     params['bias'][None, :], pool_w_scaled,
                                     n_heads, head_dim, tm)
    out = out_pad[:n]
    score = score2d[:n, 0]

    # --- TopKPooling node selection (ratio=0.5, per graph) — JAX glue
    # TODO(synk): per-graph torch.topk gather kept as a dense rank/mask in JAX.
    graph_onehot = (batch[:, None] == jnp.arange(num_graphs)[None, :])   # (n, G)
    nodes_per_graph = graph_onehot.sum(0)
    k_per_graph = jnp.ceil(0.5 * nodes_per_graph.astype(jnp.float32)).astype(jnp.int32)
    same_graph = batch[:, None] == batch[None, :]
    nidx = jnp.arange(n)
    higher = (score[None, :] > score[:, None]) | (
        (score[None, :] == score[:, None]) & (nidx[None, :] < nidx[:, None]))
    rank = jnp.sum(same_graph & higher, axis=1)               # in-graph rank (0=best)
    selected = rank < k_per_graph[batch]
    sel = (graph_onehot & selected[:, None]).astype(jnp.float32).T       # (G, n)
    sel_scaled = sel * score[None, :]                         # fold score scaling
    sel_scaled_pad = jnp.zeros((num_graphs, n_pad),
                               jnp.float32).at[:, :n].set(sel_scaled)

    # --- Kernel 4: global_add_pool(att_x, att_batch)
    global_graph_emb = pool_readout(sel_scaled_pad, out_pad, tm)  # (G, HC)

    # forward returns (data, global_graph_emb) with data.x replaced by conv output
    return out, global_graph_emb


# ----------------------------------------------------------------------------
if __name__ == "__main__":
    n_heads, in_features, head_out, final_out = 2, 16, 8, 32  # final_out unused in fwd
    hc = n_heads * head_out
    num_nodes, num_graphs = 8, 2

    key = jax.random.PRNGKey(0)
    k1, k2, k3, k4, k5 = jax.random.split(key, 5)

    glorot_lim = math.sqrt(6.0 / (in_features + hc))
    att_lim = math.sqrt(6.0 / (1 + head_out))
    params = {
        'w':       jax.random.uniform(k1, (in_features, hc), jnp.float32,
                                      -glorot_lim, glorot_lim),
        'att_src': jax.random.uniform(k2, (n_heads, head_out), jnp.float32,
                                      -att_lim, att_lim),
        'att_dst': jax.random.uniform(k3, (n_heads, head_out), jnp.float32,
                                      -att_lim, att_lim),
        'bias':    jnp.zeros((hc,), jnp.float32),              # GATConv zeros(bias)
        'pool_w':  jax.random.uniform(k4, (hc,), jnp.float32, -1.0, 1.0),
    }

    x = jax.random.normal(k5, (num_nodes, in_features), jnp.float32)
    # two graphs of 4 nodes each; includes one self loop (0,0) exercised by
    # remove_self_loops / add_self_loops
    edge_index = jnp.array([
        [0, 1, 1, 2, 2, 3, 0, 4, 5, 5, 6, 6, 7, 4],   # source j
        [1, 0, 2, 1, 3, 2, 0, 5, 4, 6, 5, 7, 4, 7],   # destination i
    ], dtype=jnp.int32)
    batch = jnp.array([0, 0, 0, 0, 1, 1, 1, 1], dtype=jnp.int32)

    new_x, global_emb = gta_ddi_block_forward(
        x, edge_index, batch, num_graphs, params, n_heads, head_out)
    jax.block_until_ready((new_x, global_emb))

    assert new_x.shape == (num_nodes, hc)
    assert global_emb.shape == (num_graphs, hc)
    assert bool(jnp.all(jnp.isfinite(new_x))) and bool(jnp.all(jnp.isfinite(global_emb)))
    print("KERNEL_OK")
</pallas_src>

<mosaic_0001>
module attributes {stable_mosaic.version = 11 : i64} {
  func.func @_proj_kernel(%arg0: i32, %arg1: memref<128x16xf32, #tpu.memory_space<vmem>>, %arg2: memref<16x16xf32, #tpu.memory_space<vmem>>, %arg3: memref<16x4xbf16, #tpu.memory_space<vmem>>, %arg4: memref<128x16xbf16, #tpu.memory_space<vmem>>, %arg5: memref<128x4xf32, #tpu.memory_space<vmem>>) attributes {dimension_semantics = [#tpu.dimension_semantics<parallel>], iteration_bounds = array<i64: 1>, scalar_prefetch = 0 : i64, scratch_operands = 0 : i64, tpu.core_type = #tpu.core_type<tc>, window_params = [{transform_indices = @transform_0, window_bounds = array<i64: 128, 16>}, {pipeline_mode = #tpu.pipeline_mode<synchronous>, transform_indices = @transform_1, window_bounds = array<i64: 16, 16>}, {pipeline_mode = #tpu.pipeline_mode<synchronous>, transform_indices = @transform_2, window_bounds = array<i64: 16, 4>}, {transform_indices = @transform_3, window_bounds = array<i64: 128, 16>}, {transform_indices = @transform_4, window_bounds = array<i64: 128, 4>}]} {
    %c0 = arith.constant 0 : index
    %c0_0 = arith.constant 0 : index
    %0 = vector.load %arg1[%c0, %c0_0] : memref<128x16xf32, #tpu.memory_space<vmem>>, vector<128x16xf32>
    %1 = arith.truncf %0 : vector<128x16xf32> to vector<128x16xbf16>
    %c0_1 = arith.constant 0 : index
    %c0_2 = arith.constant 0 : index
    %2 = vector.load %arg2[%c0_1, %c0_2] : memref<16x16xf32, #tpu.memory_space<vmem>>, vector<16x16xf32>
    %3 = arith.truncf %2 : vector<16x16xf32> to vector<16x16xbf16>
    %cst = arith.constant dense<0.000000e+00> : vector<128x16xf32>
    %4 = tpu.matmul %1, %3, %cst {dimension_numbers = #tpu.dot_dimension_numbers<[1], [0], [0], [1], [0, 0, 1, 1], [], []>} : vector<128x16xbf16>, vector<16x16xbf16>, vector<128x16xf32> -> vector<128x16xf32>
    %5 = arith.truncf %4 : vector<128x16xf32> to vector<128x16xbf16>
    %c0_3 = arith.constant 0 : index
    %c0_4 = arith.constant 0 : index
    %6 = vector.load %arg4[%c0_3, %c0_4] : memref<128x16xbf16, #tpu.memory_space<vmem>>, vector<128x16xbf16>
    tpu.vector_store %arg4[%c0_3, %c0_4], %5 {strides = array<i32>} : memref<128x16xbf16, #tpu.memory_space<vmem>>, vector<128x16xbf16>,
    %c0_5 = arith.constant 0 : index
    %c0_6 = arith.constant 0 : index
    %7 = vector.load %arg3[%c0_5, %c0_6] : memref<16x4xbf16, #tpu.memory_space<vmem>>, vector<16x4xbf16>
    %cst_7 = arith.constant dense<0.000000e+00> : vector<128x4xf32>
    %8 = tpu.matmul %5, %7, %cst_7 {dimension_numbers = #tpu.dot_dimension_numbers<[1], [0], [0], [1], [0, 0, 1, 1], [], []>} : vector<128x16xbf16>, vector<16x4xbf16>, vector<128x4xf32> -> vector<128x4xf32>
    %c0_8 = arith.constant 0 : index
    %c0_9 = arith.constant 0 : index
    %9 = vector.load %arg5[%c0_8, %c0_9] : memref<128x4xf32, #tpu.memory_space<vmem>>, vector<128x4xf32>
    tpu.vector_store %arg5[%c0_8, %c0_9], %8 {strides = array<i32>} : memref<128x4xf32, #tpu.memory_space<vmem>>, vector<128x4xf32>,
    return
  }
  func.func @transform_0(%arg0: i32) -> (i32, i32) {
    %c0_i32 = arith.constant 0 : i32
    %c0_i32_0 = arith.constant 0 : i32
    return %arg0, %c0_i32 : i32, i32
  }
  func.func @transform_1(%arg0: i32) -> (i32, i32) {
    %c0_i32 = arith.constant 0 : i32
    %c0_i32_0 = arith.constant 0 : i32
    %c0_i32_1 = arith.constant 0 : i32
    return %c0_i32, %c0_i32_0 : i32, i32
  }
  func.func @transform_2(%arg0: i32) -> (i32, i32) {
    %c0_i32 = arith.constant 0 : i32
    %c0_i32_0 = arith.constant 0 : i32
    %c0_i32_1 = arith.constant 0 : i32
    return %c0_i32, %c0_i32_0 : i32, i32
  }
  func.func @transform_3(%arg0: i32) -> (i32, i32) {
    %c0_i32 = arith.constant 0 : i32
    %c0_i32_0 = arith.constant 0 : i32
    return %arg0, %c0_i32 : i32, i32
  }
  func.func @transform_4(%arg0: i32) -> (i32, i32) {
    %c0_i32 = arith.constant 0 : i32
    %c0_i32_0 = arith.constant 0 : i32
    return %arg0, %c0_i32 : i32, i32
  }
}

</mosaic_0001>

<llo_original>
// kernel: tpu_custom_call.1
$region0: #{tpu_custom_call.1}
  #allocation0 [shape = 'u32[]', space=smem, size = 0x4, offset = 0x4, fixed_abs, tag = 'smem constant byte address 0x4 - core index']
  #allocation1 [shape = 'u32[144,128]{1,0:T(1,128)}', space=vmem, size = 0x12000, scoped, tag = 'internal scratch']
  %s0 = inlined_call_operand.vmem [shape: f32[128,16], index: 0, kind: input, shape index: {}]
  %s1 = inlined_call_operand.vmem [shape: f32[16,16], index: 1, kind: input, shape index: {}]
  %s2 = inlined_call_operand.vmem [shape: bf16[16,4], index: 2, kind: input, shape index: {}]
  %s3 = inlined_call_operand.vmem [shape: bf16[128,16], index: 3, kind: output, shape index: {0}]
  %s4 = inlined_call_operand.vmem [shape: f32[128,4], index: 4, kind: output, shape index: {1}]
  %5 = xla_tuple %s3, %s4
  %s6 = sld [smem:[#allocation0]]
  $region30: #{tpu_custom_call.1} parent=0
    _
  %s8 = ssub.s32 1, %s6
  %s9 = scalar_select 0, %s8, %s6
  // Predicated region
  $region2: #{tpu_custom_call.1} parent=0 // pred_check
    _
  $region3: #{tpu_custom_call.1} parent=0 // pred_check_branch
    %11 = sbr.rel (0) target = $region5
  $region4: #{tpu_custom_call.1} parent=0 // pred_region
    _
  $region5: #{tpu_custom_call.1} parent=0 // pred_fallthru
    _
  // Predicated region
  $region6: #{tpu_custom_call.1} parent=0 // pred_check
    _
  $region7: #{tpu_custom_call.1} parent=0 // pred_check_branch
    %13 = sbr.rel (0) target = $region9
  $region8: #{tpu_custom_call.1} parent=0 // pred_region
    _
  $region9: #{tpu_custom_call.1} parent=0 // pred_fallthru
    _
  // Predicated region
  $region10: #{tpu_custom_call.1} parent=0 // pred_check
    _
  $region11: #{tpu_custom_call.1} parent=0 // pred_check_branch
    %15 = sbr.rel (0) target = $region13
  $region12: #{tpu_custom_call.1} parent=0 // pred_region
    _
  $region13: #{tpu_custom_call.1} parent=0 // pred_fallthru
    _
  %v17 = vld [vmem:[%s0] sm:$0xff]
  %v18 = vld [vmem:[%s0 + $0x8] sm:$0xff]
  %v19 = vld [vmem:[%s0 + $0x10] sm:$0xff]
  %v20 = vld [vmem:[%s0 + $0x18] sm:$0xff]
  %v21 = vld [vmem:[%s0 + $0x20] sm:$0xff]
  %v22 = vld [vmem:[%s0 + $0x28] sm:$0xff]
  %v23 = vld [vmem:[%s0 + $0x30] sm:$0xff]
  %v24 = vld [vmem:[%s0 + $0x38] sm:$0xff]
  %v25 = vld [vmem:[%s0 + $0x40] sm:$0xff]
  %v26 = vld [vmem:[%s0 + $0x48] sm:$0xff]
  %v27 = vld [vmem:[%s0 + $0x50] sm:$0xff]
  %v28 = vld [vmem:[%s0 + $0x58] sm:$0xff]
  %v29 = vld [vmem:[%s0 + $0x60] sm:$0xff]
  %v30 = vld [vmem:[%s0 + $0x68] sm:$0xff]
  %v31 = vld [vmem:[%s0 + $0x70] sm:$0xff]
  %v32 = vld [vmem:[%s0 + $0x78] sm:$0xff]
  %v33 = vpack.c.bf16 %v18, %v17
  %v34 = vpack.c.bf16 %v20, %v19
  %v35 = vpack.c.bf16 %v22, %v21
  %v36 = vpack.c.bf16 %v24, %v23
  %v37 = vpack.c.bf16 %v26, %v25
  %v38 = vpack.c.bf16 %v28, %v27
  %v39 = vpack.c.bf16 %v30, %v29
  %v40 = vpack.c.bf16 %v32, %v31
  %v41 = vld [vmem:[%s1] sm:$0xff]
  %v42 = vld [vmem:[%s1 + $0x8] sm:$0xff]
  %v43 = vpack.c.bf16 %v42, %v41
  %vm44 = vcmask 130048
  %v46 = vsel %vm44, %v33, 0
  %v49 = vsel %vm44, %v34, 0
  %v52 = vsel %vm44, %v35, 0
  %v55 = vsel %vm44, %v36, 0
  %v58 = vsel %vm44, %v37, 0
  %v61 = vsel %vm44, %v38, 0
  %v64 = vsel %vm44, %v39, 0
  %v67 = vsel %vm44, %v40, 0
  %69 = vmatprep.subr.bf16.mxu0 0
  %70 = vmatpush1.bf16.msra.mxu0 0
  %71 = vmatprep.subr.bf16.mxu0 0
  %72 = vmatpush1.bf16.msra.mxu0 0
  %73 = vmatprep.subr.bf16.mxu0 0
  %74 = vmatpush1.bf16.msra.mxu0 0
  %75 = vmatprep.subr.bf16.mxu0 0
  %76 = vmatpush1.bf16.msra.mxu0 0
  %77 = vmatprep.subr.bf16.mxu0 0
  %78 = vmatpush1.bf16.msra.mxu0 0
  %79 = vmatprep.subr.bf16.mxu0 0
  %80 = vmatpush1.bf16.msra.mxu0 0
  %81 = vmatprep.subr.bf16.mxu0 0
  %82 = vmatpush1.bf16.msra.mxu0 0
  %83 = vmatprep.subr.bf16.mxu0 0
  %84 = vmatpush1.bf16.msra.mxu0 %v43
  %85 = vmatprep.subr.bf16.mxu0 0
  %86 = vmatpush2.bf16.msra.mxu0 0
  %87 = vmatprep.subr.bf16.mxu0 0
  %88 = vmatpush2.bf16.msra.mxu0 0
  %89 = vmatprep.subr.bf16.mxu0 0
  %90 = vmatpush2.bf16.msra.mxu0 0
  %91 = vmatprep.subr.bf16.mxu0 0
  %92 = vmatpush2.bf16.msra.mxu0 0
  %93 = vmatprep.subr.bf16.mxu0 0
  %94 = vmatpush2.bf16.msra.mxu0 0
  %95 = vmatprep.subr.bf16.mxu0 0
  %96 = vmatpush2.bf16.msra.mxu0 0
  %97 = vmatprep.subr.bf16.mxu0 0
  %98 = vmatpush2.bf16.msra.mxu0 0
  %99 = vmatprep.subr.bf16.mxu0 0
  %100 = vmatpush2.bf16.msra.mxu0 0
  %101 = vmatprep.mubr.bf16.mxu0 0
  %102 = vmatmul.mubr.bf16.gmra.mxu0 %v46
  %v103 = vpop.f32.mrf.mxu0
  %v104 = vadd.f32 0.0, %v103
  %v105 = vpop.f32.mrf.mxu0
  %v106 = vpop.f32.mrf.mxu0
  %v107 = vadd.f32 0.0, %v106
  %v108 = vpop.f32.mrf.mxu0
  %109 = vmatprep.mubr.bf16.mxu0 0
  %110 = vmatmul.mubr.bf16.gmra.mxu0 %v49
  %v111 = vpop.f32.mrf.mxu0
  %v112 = vadd.f32 0.0, %v111
  %v113 = vpop.f32.mrf.mxu0
  %v114 = vpop.f32.mrf.mxu0
  %v115 = vadd.f32 0.0, %v114
  %v116 = vpop.f32.mrf.mxu0
  %117 = vmatprep.mubr.bf16.mxu0 0
  %118 = vmatmul.mubr.bf16.gmra.mxu0 %v52
  %v119 = vpop.f32.mrf.mxu0
  %v120 = vadd.f32 0.0, %v119
  %v121 = vpop.f32.mrf.mxu0
  %v122 = vpop.f32.mrf.mxu0
  %v123 = vadd.f32 0.0, %v122
  %v124 = vpop.f32.mrf.mxu0
  %125 = vmatprep.mubr.bf16.mxu0 0
  %126 = vmatmul.mubr.bf16.gmra.mxu0 %v55
  %v127 = vpop.f32.mrf.mxu0
  %v128 = vadd.f32 0.0, %v127
  %v129 = vpop.f32.mrf.mxu0
  %v130 = vpop.f32.mrf.mxu0
  %v131 = vadd.f32 0.0, %v130
  %v132 = vpop.f32.mrf.mxu0
  %133 = vmatprep.mubr.bf16.mxu0 0
  %134 = vmatmul.mubr.bf16.gmra.mxu0 %v58
  %v135 = vpop.f32.mrf.mxu0
  %v136 = vadd.f32 0.0, %v135
  %v137 = vpop.f32.mrf.mxu0
  %v138 = vpop.f32.mrf.mxu0
  %v139 = vadd.f32 0.0, %v138
  %v140 = vpop.f32.mrf.mxu0
  %141 = vmatprep.mubr.bf16.mxu0 0
  %142 = vmatmul.mubr.bf16.gmra.mxu0 %v61
  %v143 = vpop.f32.mrf.mxu0
  %v144 = vadd.f32 0.0, %v143
  %v145 = vpop.f32.mrf.mxu0
  %v146 = vpop.f32.mrf.mxu0
  %v147 = vadd.f32 0.0, %v146
  %v148 = vpop.f32.mrf.mxu0
  %149 = vmatprep.mubr.bf16.mxu0 0
  %150 = vmatmul.mubr.bf16.gmra.mxu0 %v64
  %v151 = vpop.f32.mrf.mxu0
  %v152 = vadd.f32 0.0, %v151
  %v153 = vpop.f32.mrf.mxu0
  %v154 = vpop.f32.mrf.mxu0
  %v155 = vadd.f32 0.0, %v154
  %v156 = vpop.f32.mrf.mxu0
  %157 = vmatprep.mubr.bf16.mxu0 0
  %158 = vmatmul.mubr.bf16.gmra.mxu0 %v67
  %v159 = vpop.f32.mrf.mxu0
  %v160 = vadd.f32 0.0, %v159
  %v161 = vpop.f32.mrf.mxu0
  %v162 = vpop.f32.mrf.mxu0
  %v163 = vadd.f32 0.0, %v162
  %v164 = vpop.f32.mrf.mxu0
  %165 = vdwg.mxu0
  %v166 = vpack.c.bf16 %v107, %v104
  %v167 = vpack.c.bf16 %v115, %v112
  %v168 = vpack.c.bf16 %v123, %v120
  %v169 = vpack.c.bf16 %v131, %v128
  %v170 = vpack.c.bf16 %v139, %v136
  %v171 = vpack.c.bf16 %v147, %v144
  %v172 = vpack.c.bf16 %v155, %v152
  %v173 = vpack.c.bf16 %v163, %v160
  %v182 = vunpack.c.l.b16 %v166
  %v183 = vunpack.c.h.b16 %v166
  %v184 = vunpack.c.l.b16 %v167
  %v185 = vunpack.c.h.b16 %v167
  %v186 = vunpack.c.l.b16 %v168
  %v187 = vunpack.c.h.b16 %v168
  %v188 = vunpack.c.l.b16 %v169
  %v189 = vunpack.c.h.b16 %v169
  %v190 = vunpack.c.l.b16 %v170
  %v191 = vunpack.c.h.b16 %v170
  %v192 = vunpack.c.l.b16 %v171
  %v193 = vunpack.c.h.b16 %v171
  %v194 = vunpack.c.l.b16 %v172
  %v195 = vunpack.c.h.b16 %v172
  %v196 = vunpack.c.l.b16 %v173
  %v197 = vunpack.c.h.b16 %v173
  %v198 = vpack.c.b16 %v182, %v182
  %v199 = vpack.c.b16 %v183, %v183
  %v200 = vpack.c.b16 %v184, %v184
  %v201 = vpack.c.b16 %v185, %v185
  %v202 = vpack.c.b16 %v186, %v186
  %v203 = vpack.c.b16 %v187, %v187
  %v204 = vpack.c.b16 %v188, %v188
  %v205 = vpack.c.b16 %v189, %v189
  %v206 = vpack.c.b16 %v190, %v190
  %v207 = vpack.c.b16 %v191, %v191
  %v208 = vpack.c.b16 %v192, %v192
  %v209 = vpack.c.b16 %v193, %v193
  %v210 = vpack.c.b16 %v194, %v194
  %v211 = vpack.c.b16 %v195, %v195
  %v212 = vpack.c.b16 %v196, %v196
  %v213 = vpack.c.b16 %v197, %v197
  %vm230 = vcmask 125952
  %231 = vst.msk [vmem:[%s3] sm:$0xf] %vm230, %v198
  %232 = vst.msk [vmem:[%s3 + $0x4] sm:$0xf] %vm230, %v199
  %233 = vst.msk [vmem:[%s3 + $0x8] sm:$0xf] %vm230, %v200
  %234 = vst.msk [vmem:[%s3 + $0xc] sm:$0xf] %vm230, %v201
  %235 = vst.msk [vmem:[%s3 + $0x10] sm:$0xf] %vm230, %v202
  %236 = vst.msk [vmem:[%s3 + $0x14] sm:$0xf] %vm230, %v203
  %237 = vst.msk [vmem:[%s3 + $0x18] sm:$0xf] %vm230, %v204
  %238 = vst.msk [vmem:[%s3 + $0x1c] sm:$0xf] %vm230, %v205
  %239 = vst.msk [vmem:[%s3 + $0x20] sm:$0xf] %vm230, %v206
  %240 = vst.msk [vmem:[%s3 + $0x24] sm:$0xf] %vm230, %v207
  %241 = vst.msk [vmem:[%s3 + $0x28] sm:$0xf] %vm230, %v208
  %242 = vst.msk [vmem:[%s3 + $0x2c] sm:$0xf] %vm230, %v209
  %243 = vst.msk [vmem:[%s3 + $0x30] sm:$0xf] %vm230, %v210
  %244 = vst.msk [vmem:[%s3 + $0x34] sm:$0xf] %vm230, %v211
  %245 = vst.msk [vmem:[%s3 + $0x38] sm:$0xf] %vm230, %v212
  %246 = vst.msk [vmem:[%s3 + $0x3c] sm:$0xf] %vm230, %v213
  %v247 = vld [vmem:[%s2] sm:$0xf]
  %v248 = vld [vmem:[%s2 + $0x4] sm:$0xf]
  %v251 = vunpack.c.l.b16 %v247
  %v252 = vunpack.c.l.b16 %v248
  %v253 = vpack.c.b16 %v252, %v251
  %v256 = vsel %vm44, %v166, 0
  %v259 = vsel %vm44, %v167, 0
  %v262 = vsel %vm44, %v168, 0
  %v265 = vsel %vm44, %v169, 0
  %v268 = vsel %vm44, %v170, 0
  %v271 = vsel %vm44, %v171, 0
  %v274 = vsel %vm44, %v172, 0
  %v277 = vsel %vm44, %v173, 0
  %279 = vmatprep.subr.bf16.mxu0 0
  %280 = vmatpush1.bf16.msra.mxu0 0
  %281 = vmatprep.subr.bf16.mxu0 0
  %282 = vmatpush1.bf16.msra.mxu0 0
  %283 = vmatprep.subr.bf16.mxu0 0
  %284 = vmatpush1.bf16.msra.mxu0 0
  %285 = vmatprep.subr.bf16.mxu0 0
  %286 = vmatpush1.bf16.msra.mxu0 0
  %287 = vmatprep.subr.bf16.mxu0 0
  %288 = vmatpush1.bf16.msra.mxu0 0
  %289 = vmatprep.subr.bf16.mxu0 0
  %290 = vmatpush1.bf16.msra.mxu0 0
  %291 = vmatprep.subr.bf16.mxu0 0
  %292 = vmatpush1.bf16.msra.mxu0 0
  %293 = vmatprep.subr.bf16.mxu0 0
  %294 = vmatpush1.bf16.msra.mxu0 %v253
  %295 = vmatprep.subr.bf16.mxu0 0
  %296 = vmatpush2.bf16.msra.mxu0 0
  %297 = vmatprep.subr.bf16.mxu0 0
  %298 = vmatpush2.bf16.msra.mxu0 0
  %299 = vmatprep.subr.bf16.mxu0 0
  %300 = vmatpush2.bf16.msra.mxu0 0
  %301 = vmatprep.subr.bf16.mxu0 0
  %302 = vmatpush2.bf16.msra.mxu0 0
  %303 = vmatprep.subr.bf16.mxu0 0
  %304 = vmatpush2.bf16.msra.mxu0 0
  %305 = vmatprep.subr.bf16.mxu0 0
  %306 = vmatpush2.bf16.msra.mxu0 0
  %307 = vmatprep.subr.bf16.mxu0 0
  %308 = vmatpush2.bf16.msra.mxu0 0
  %309 = vmatprep.subr.bf16.mxu0 0
  %310 = vmatpush2.bf16.msra.mxu0 0
  %311 = vmatprep.mubr.bf16.mxu0 0
  %312 = vmatmul.mubr.bf16.gmra.mxu0 %v256
  %v313 = vpop.f32.mrf.mxu0
  %v314 = vadd.f32 0.0, %v313
  %v315 = vpop.f32.mrf.mxu0
  %v316 = vpop.f32.mrf.mxu0
  %v317 = vadd.f32 0.0, %v316
  %v318 = vpop.f32.mrf.mxu0
  %319 = vmatprep.mubr.bf16.mxu0 0
  %320 = vmatmul.mubr.bf16.gmra.mxu0 %v259
  %v321 = vpop.f32.mrf.mxu0
  %v322 = vadd.f32 0.0, %v321
  %v323 = vpop.f32.mrf.mxu0
  %v324 = vpop.f32.mrf.mxu0
  %v325 = vadd.f32 0.0, %v324
  %v326 = vpop.f32.mrf.mxu0
  %327 = vmatprep.mubr.bf16.mxu0 0
  %328 = vmatmul.mubr.bf16.gmra.mxu0 %v262
  %v329 = vpop.f32.mrf.mxu0
  %v330 = vadd.f32 0.0, %v329
  %v331 = vpop.f32.mrf.mxu0
  %v332 = vpop.f32.mrf.mxu0
  %v333 = vadd.f32 0.0, %v332
  %v334 = vpop.f32.mrf.mxu0
  %335 = vmatprep.mubr.bf16.mxu0 0
  %336 = vmatmul.mubr.bf16.gmra.mxu0 %v265
  %v337 = vpop.f32.mrf.mxu0
  %v338 = vadd.f32 0.0, %v337
  %v339 = vpop.f32.mrf.mxu0
  %v340 = vpop.f32.mrf.mxu0
  %v341 = vadd.f32 0.0, %v340
  %v342 = vpop.f32.mrf.mxu0
  %343 = vmatprep.mubr.bf16.mxu0 0
  %344 = vmatmul.mubr.bf16.gmra.mxu0 %v268
  %v345 = vpop.f32.mrf.mxu0
  %v346 = vadd.f32 0.0, %v345
  %v347 = vpop.f32.mrf.mxu0
  %v348 = vpop.f32.mrf.mxu0
  %v349 = vadd.f32 0.0, %v348
  %v350 = vpop.f32.mrf.mxu0
  %351 = vmatprep.mubr.bf16.mxu0 0
  %352 = vmatmul.mubr.bf16.gmra.mxu0 %v271
  %v353 = vpop.f32.mrf.mxu0
  %v354 = vadd.f32 0.0, %v353
  %v355 = vpop.f32.mrf.mxu0
  %v356 = vpop.f32.mrf.mxu0
  %v357 = vadd.f32 0.0, %v356
  %v358 = vpop.f32.mrf.mxu0
  %359 = vmatprep.mubr.bf16.mxu0 0
  %360 = vmatmul.mubr.bf16.gmra.mxu0 %v274
  %v361 = vpop.f32.mrf.mxu0
  %v362 = vadd.f32 0.0, %v361
  %v363 = vpop.f32.mrf.mxu0
  %v364 = vpop.f32.mrf.mxu0
  %v365 = vadd.f32 0.0, %v364
  %v366 = vpop.f32.mrf.mxu0
  %367 = vmatprep.mubr.bf16.mxu0 0
  %368 = vmatmul.mubr.bf16.gmra.mxu0 %v277
  %v369 = vpop.f32.mrf.mxu0
  %v370 = vadd.f32 0.0, %v369
  %v371 = vpop.f32.mrf.mxu0
  %v372 = vpop.f32.mrf.mxu0
  %v373 = vadd.f32 0.0, %v372
  %v374 = vpop.f32.mrf.mxu0
  %375 = vdwg.mxu0
  %vm376 = vcmask 31744
  %377 = vst.msk [vmem:[%s4] sm:$0xff] %vm376, %v314
  %378 = vst.msk [vmem:[%s4 + $0x8] sm:$0xff] %vm376, %v317
  %379 = vst.msk [vmem:[%s4 + $0x10] sm:$0xff] %vm376, %v322
  %380 = vst.msk [vmem:[%s4 + $0x18] sm:$0xff] %vm376, %v325
  %381 = vst.msk [vmem:[%s4 + $0x20] sm:$0xff] %vm376, %v330
  %382 = vst.msk [vmem:[%s4 + $0x28] sm:$0xff] %vm376, %v333
  %383 = vst.msk [vmem:[%s4 + $0x30] sm:$0xff] %vm376, %v338
  %384 = vst.msk [vmem:[%s4 + $0x38] sm:$0xff] %vm376, %v341
  %385 = vst.msk [vmem:[%s4 + $0x40] sm:$0xff] %vm376, %v346
  %386 = vst.msk [vmem:[%s4 + $0x48] sm:$0xff] %vm376, %v349
  %387 = vst.msk [vmem:[%s4 + $0x50] sm:$0xff] %vm376, %v354
  %388 = vst.msk [vmem:[%s4 + $0x58] sm:$0xff] %vm376, %v357
  %389 = vst.msk [vmem:[%s4 + $0x60] sm:$0xff] %vm376, %v362
  %390 = vst.msk [vmem:[%s4 + $0x68] sm:$0xff] %vm376, %v365
  %391 = vst.msk [vmem:[%s4 + $0x70] sm:$0xff] %vm376, %v370
  %392 = vst.msk [vmem:[%s4 + $0x78] sm:$0xff] %vm376, %v373
  // Predicated region
  $region14: #{tpu_custom_call.1} parent=0 // pred_check
    _
  $region15: #{tpu_custom_call.1} parent=0 // pred_check_branch
    %394 = sbr.rel (0) target = $region17
  $region16: #{tpu_custom_call.1} parent=0 // pred_region
    _
  $region17: #{tpu_custom_call.1} parent=0 // pred_fallthru
    _
  // Predicated region
  $region18: #{tpu_custom_call.1} parent=0 // pred_check
    _
  $region19: #{tpu_custom_call.1} parent=0 // pred_check_branch
    %396 = sbr.rel (0) target = $region21
  $region20: #{tpu_custom_call.1} parent=0 // pred_region
    _
  $region21: #{tpu_custom_call.1} parent=0 // pred_fallthru
    _
  // Predicated region
  $region22: #{tpu_custom_call.1} parent=0 // pred_check
    _
  $region23: #{tpu_custom_call.1} parent=0 // pred_check_branch
    %398 = sbr.rel (0) target = $region25
  $region24: #{tpu_custom_call.1} parent=0 // pred_region
    _
  $region25: #{tpu_custom_call.1} parent=0 // pred_fallthru
    _
  // Predicated region
  $region26: #{tpu_custom_call.1} parent=0 // pred_check
    _
  $region27: #{tpu_custom_call.1} parent=0 // pred_check_branch
    %400 = sbr.rel (0) target = $region29
  $region28: #{tpu_custom_call.1} parent=0 // pred_region
    _
  $region29: #{tpu_custom_call.1} parent=0 // pred_fallthru
    _

</llo_original>
